<compile_context>
chip_gen: v6e
topology: v6e:2x2x1
jax: 0.10.0
libtpu: 0.0.40
codegen_flags: <defaults>
</compile_context>

<pallas_src>
import jax
import jax.numpy as jnp
from jax import lax
from jax.experimental import pallas as pl
from jax.experimental.pallas import tpu as pltpu

_LANES = 128
_SUBLANES = 8


def _round_up(x: int, m: int) -> int:
    return ((x + m - 1) // m) * m


def _cdiv(a: int, b: int) -> int:
    return (a + b - 1) // b


def _device_defaults():
    """(num_shards, tile_rows) tuned per chip generation.

    v7x: 2 TensorCores + highest HBM BW -> shard across cores, 4 MiB blocks.
    v5e/v6e: single TC -> one long stream, 2 MiB blocks.
    """
    try:
        kind = jax.devices()[0].device_kind.lower()
    except Exception:  # noqa: BLE001
        kind = ""
    if "v7" in kind or "7x" in kind:
        return 2, 8192
    return 1, 4096


# ----------------------------------------------------------------------------
# Pallas kernel: per-shard partial sum of |a - b| over a stream of
# (tile_r, 128) blocks -> lane-dense (1, 8, 128) partial slab per shard.
# ----------------------------------------------------------------------------
def _make_l1_kernel(*, rows, tile_r, acc_rows, inner, needs_mask):
    def kernel(a_ref, b_ref, out_ref, acc_ref):
        c = pl.program_id(0)          # shard ("parallel") axis
        i = pl.program_id(1)          # reduction ("arbitrary") axis, last

        @pl.when(i == 0)
        def _():
            acc_ref[...] = jnp.zeros_like(acc_ref)

        # Cast to f32 inside the kernel; accumulation is always f32.
        a = a_ref[...].astype(jnp.float32)
        b = b_ref[...].astype(jnp.float32)
        d = jnp.abs(a - b)

        if needs_mask:
            # Zero rows beyond the valid row count (partial / clamped blocks).
            start = (c * inner + i) * tile_r
            row_ids = start + lax.broadcasted_iota(
                jnp.int32, (tile_r, _LANES), 0)
            d = jnp.where(row_ids < rows, d, 0.0)

        # (tile_r, 128) -> (tile_r/acc_rows, acc_rows, 128); summing the
        # leading axis is pure VPU adds into acc_rows/8 independent (8,128)
        # accumulator chains (no XLU, short dependency chain).
        acc_ref[...] += jnp.sum(
            d.reshape(tile_r // acc_rows, acc_rows, _LANES), axis=0)

        @pl.when(i == pl.num_programs(1) - 1)
        def _():
            acc = acc_ref[...]
            if acc_rows > _SUBLANES:
                acc = jnp.sum(
                    acc.reshape(acc_rows // _SUBLANES, _SUBLANES, _LANES),
                    axis=0)
            out_ref[0] = acc

    return kernel


def l1_loss_pallas(outputs: jax.Array, targets: jax.Array,
                   *, tile_rows: int | None = None,
                   num_shards: int | None = None) -> jax.Array:
    """Mean absolute error via a tiled, HBM-streaming Pallas TPU reduction."""
    assert outputs.shape == targets.shape, "shape mismatch"
    if num_shards is None or tile_rows is None:
        d_shards, d_tile = _device_defaults()
        num_shards = d_shards if num_shards is None else num_shards
        tile_rows = d_tile if tile_rows is None else tile_rows

    n_elem = outputs.size
    a = outputs.reshape(-1)
    b = targets.reshape(-1)
    in_itemsize = jnp.dtype(a.dtype).itemsize

    # Lane alignment: flatten/reshape of a contiguous array is free; a copy
    # only happens when numel is not a multiple of 128.
    rem = n_elem % _LANES
    if rem:
        # TODO(synk): non-128-multiple inputs pay one extra HBM pass here;
        # tile-level raggedness is otherwise handled fully in-kernel.
        a = jnp.pad(a, (0, _LANES - rem))
        b = jnp.pad(b, (0, _LANES - rem))
    rows = a.size // _LANES
    a2 = a.reshape(rows, _LANES)
    b2 = b.reshape(rows, _LANES)

    # Sublane packing per dtype (f32: 8, bf16: 16, int8/fp8: 32); scale the
    # row tile so per-step DMA bytes stay constant across dtypes.
    packing = max(_SUBLANES, 32 // max(1, in_itemsize))
    eff_rows = max(packing, tile_rows * max(1, 4 // in_itemsize))

    tile_r = min(eff_rows, _round_up(_cdiv(rows, num_shards), packing))
    tile_r = _round_up(tile_r, packing)

    # Multiple independent (8,128) accumulator chains when the tile allows.
    acc_rows = 64 if tile_r % 64 == 0 else _SUBLANES

    inner = _cdiv(rows, num_shards * tile_r)
    last_block = _cdiv(rows, tile_r) - 1
    needs_mask = (num_shards * inner * tile_r) != rows

    def in_map(c, i):
        # Clamp logically-OOB blocks (ragged shard split) into bounds; the
        # in-kernel row mask zeroes their contribution entirely.
        return (jnp.minimum(c * inner + i, last_block), 0)

    kernel = _make_l1_kernel(rows=rows, tile_r=tile_r, acc_rows=acc_rows,
                             inner=inner, needs_mask=needs_mask)

    # 2 inputs x 2 pipeline buffers x tile bytes, plus accumulator/output.
    vmem_limit = int(max(32 * 1024 * 1024,
                         6 * tile_r * _LANES * in_itemsize))

    partials = pl.pallas_call(
        kernel,
        out_shape=jax.ShapeDtypeStruct((num_shards, _SUBLANES, _LANES),
                                       jnp.float32),
        grid_spec=pltpu.PrefetchScalarGridSpec(
            num_scalar_prefetch=0,
            grid=(num_shards, inner),
            in_specs=[
                pl.BlockSpec((tile_r, _LANES), in_map),
                pl.BlockSpec((tile_r, _LANES), in_map),
            ],
            out_specs=pl.BlockSpec((1, _SUBLANES, _LANES),
                                   lambda c, i: (c, 0, 0)),
            scratch_shapes=[pltpu.VMEM((acc_rows, _LANES), jnp.float32)],
        ),
        compiler_params=pltpu.CompilerParams(
            dimension_semantics=("parallel", "arbitrary"),
            vmem_limit_bytes=vmem_limit,
        ),
        cost_estimate=pl.CostEstimate(
            flops=3 * rows * _LANES,
            transcendentals=0,
            bytes_accessed=2 * rows * _LANES * in_itemsize
            + num_shards * _SUBLANES * _LANES * 4,
        ),
    )(a2, b2)

    # Final tiny reduction (num_shards * 8 * 128 floats) + mean.
    return jnp.sum(partials) / jnp.float32(n_elem)


# ----------------------------------------------------------------------------
# Faithful port of the PyTorch module semantics
# ----------------------------------------------------------------------------
class LossNotIntegrated:
    def __init__(self, fft_weight: float = 0.01):
        # The PyTorch __init__ registers no parameters; it only prints.
        self.fft_weight = fft_weight
        print("Caution: Loss is not intergrated in loss.py, but running in wrapper.py")

    def forward(self, outputs, targets):
        raise Exception("Class LossNotIntergrated should not be called.")

    def __call__(self, outputs, targets):
        return self.forward(outputs, targets)


# ----------------------------------------------------------------------------
# Demo / self-test
# ----------------------------------------------------------------------------
if __name__ == "__main__":
    key = jax.random.PRNGKey(0)
    k1, k2, k3, k4, k5, k6 = jax.random.split(key, 6)

    # NCHW activations: batch=2, channels=4, spatial=16x16
    outputs = jax.random.normal(k1, (2, 4, 16, 16), dtype=jnp.float32)
    targets = jax.random.normal(k2, (2, 4, 16, 16), dtype=jnp.float32)

    # 1) Reproduce module semantics exactly: forward() must raise.
    module = LossNotIntegrated(fft_weight=0.01)
    raised = False
    try:
        module(outputs, targets)
    except Exception as e:  # noqa: BLE001
        raised = str(e) == "Class LossNotIntergrated should not be called."
    assert raised, "LossNotIntegrated.forward did not raise as expected"

    # 2) Pallas L1 kernel vs pure-JAX reference (single-block path).
    loss = l1_loss_pallas(outputs, targets)
    jax.block_until_ready(loss)
    ref = jnp.mean(jnp.abs(outputs - targets))
    assert jnp.allclose(loss, ref, atol=1e-5, rtol=1e-5), (loss, ref)

    # 3) 128-aligned but tile-ragged: zero-copy path + in-kernel row masking.
    o3 = jax.random.normal(k3, (1, 5, 16, 128), dtype=jnp.float32)   # 80 rows
    t3 = jax.random.normal(k4, (1, 5, 16, 128), dtype=jnp.float32)
    l3 = l1_loss_pallas(o3, t3, tile_rows=32, num_shards=1)
    jax.block_until_ready(l3)
    r3 = jnp.mean(jnp.abs(o3 - t3))
    assert jnp.allclose(l3, r3, atol=1e-5, rtol=1e-5), (l3, r3)

    # 4) Misaligned shape (lane-pad fallback) + multi-step grid + masking.
    o4 = jax.random.normal(k5, (2, 3, 33, 37), dtype=jnp.float32)    # 7326 elems
    t4 = jax.random.normal(k6, (2, 3, 33, 37), dtype=jnp.float32)
    l4 = l1_loss_pallas(o4, t4, tile_rows=16, num_shards=1)
    jax.block_until_ready(l4)
    r4 = jnp.mean(jnp.abs(o4 - t4))
    assert jnp.allclose(l4, r4, atol=1e-5, rtol=1e-5), (l4, r4)

    # 5) bf16 inputs: exercises (16,128) sublane packing and the 64-row
    #    multi-chain accumulator path.
    kb1, kb2 = jax.random.split(k6)
    o5 = jax.random.normal(kb1, (4, 8, 32, 32), dtype=jnp.bfloat16)
    t5 = jax.random.normal(kb2, (4, 8, 32, 32), dtype=jnp.bfloat16)
    l5 = l1_loss_pallas(o5, t5, tile_rows=32, num_shards=1)
    jax.block_until_ready(l5)
    r5 = jnp.mean(jnp.abs(o5.astype(jnp.float32) - t5.astype(jnp.float32)))
    assert jnp.allclose(l5, r5, atol=1e-5, rtol=1e-5), (l5, r5)

    print("KERNEL_OK")
</pallas_src>

<mosaic_0001>
module attributes {stable_mosaic.version = 11 : i64} {
  func.func @kernel(%arg0: i32, %arg1: i32, %arg2: memref<16x128xf32, #tpu.memory_space<vmem>>, %arg3: memref<16x128xf32, #tpu.memory_space<vmem>>, %arg4: memref<1x8x128xf32, #tpu.memory_space<vmem>>, %arg5: memref<8x128xf32, #tpu.memory_space<vmem>>) attributes {dimension_semantics = [#tpu.dimension_semantics<parallel>, #tpu.dimension_semantics<arbitrary>], iteration_bounds = array<i64: 1, 1>, scalar_prefetch = 0 : i64, scratch_operands = 1 : i64, tpu.core_type = #tpu.core_type<tc>, window_params = [{transform_indices = @transform_0, window_bounds = array<i64: 16, 128>}, {transform_indices = @transform_1, window_bounds = array<i64: 16, 128>}, {transform_indices = @transform_2, window_bounds = array<i64: 1, 8, 128>}]} {
    %c0_i32 = arith.constant 0 : i32
    %0 = arith.cmpi eq, %arg1, %c0_i32 : i32
    %1 = arith.extui %0 : i1 to i32
    %c0_i32_0 = arith.constant 0 : i32
    %2 = arith.cmpi ne, %1, %c0_i32_0 : i32
    scf.if %2 {
      %cst_10 = arith.constant 0.000000e+00 : f32
      %15 = vector.broadcast %cst_10 : f32 to vector<8x128xf32>
      %c0_11 = arith.constant 0 : index
      %c0_12 = arith.constant 0 : index
      %16 = vector.load %arg5[%c0_11, %c0_12] : memref<8x128xf32, #tpu.memory_space<vmem>>, vector<8x128xf32>
      tpu.vector_store %arg5[%c0_11, %c0_12], %15 {strides = array<i32>} : memref<8x128xf32, #tpu.memory_space<vmem>>, vector<8x128xf32>,
    } else {
    }
    %c0 = arith.constant 0 : index
    %c0_1 = arith.constant 0 : index
    %3 = vector.load %arg2[%c0, %c0_1] : memref<16x128xf32, #tpu.memory_space<vmem>>, vector<16x128xf32>
    %c0_2 = arith.constant 0 : index
    %c0_3 = arith.constant 0 : index
    %4 = vector.load %arg3[%c0_2, %c0_3] : memref<16x128xf32, #tpu.memory_space<vmem>>, vector<16x128xf32>
    %5 = arith.subf %3, %4 : vector<16x128xf32>
    %6 = math.absf %5 : vector<16x128xf32>
    %c0_4 = arith.constant 0 : index
    %c0_5 = arith.constant 0 : index
    %7 = vector.load %arg5[%c0_4, %c0_5] : memref<8x128xf32, #tpu.memory_space<vmem>>, vector<8x128xf32>
    %8 = vector.shape_cast %6 : vector<16x128xf32> to vector<2x8x128xf32>
    %cst = arith.constant dense<0.000000e+00> : vector<8x128xf32>
    %9 = vector.multi_reduction <add>, %8, %cst [0] : vector<2x8x128xf32> to vector<8x128xf32>
    %10 = arith.addf %7, %9 : vector<8x128xf32>
    %c0_6 = arith.constant 0 : index
    %c0_7 = arith.constant 0 : index
    %11 = vector.load %arg5[%c0_6, %c0_7] : memref<8x128xf32, #tpu.memory_space<vmem>>, vector<8x128xf32>
    tpu.vector_store %arg5[%c0_6, %c0_7], %10 {strides = array<i32>} : memref<8x128xf32, #tpu.memory_space<vmem>>, vector<8x128xf32>,
    %c0_i32_8 = arith.constant 0 : i32
    %12 = arith.cmpi eq, %arg1, %c0_i32_8 : i32
    %13 = arith.extui %12 : i1 to i32
    %c0_i32_9 = arith.constant 0 : i32
    %14 = arith.cmpi ne, %13, %c0_i32_9 : i32
    scf.if %14 {
      %c0_10 = arith.constant 0 : index
      %c0_11 = arith.constant 0 : index
      %15 = vector.load %arg5[%c0_10, %c0_11] : memref<8x128xf32, #tpu.memory_space<vmem>>, vector<8x128xf32>
      %c0_12 = arith.constant 0 : index
      %c0_13 = arith.constant 0 : index
      %c0_14 = arith.constant 0 : index
      %16 = vector.load %arg4[%c0_12, %c0_13, %c0_14] : memref<1x8x128xf32, #tpu.memory_space<vmem>>, vector<1x8x128xf32>
      %17 = vector.shape_cast %16 : vector<1x8x128xf32> to vector<8x128xf32>
      %18 = vector.shape_cast %15 : vector<8x128xf32> to vector<1x8x128xf32>
      tpu.vector_store %arg4[%c0_12, %c0_13, %c0_14], %18 {strides = array<i32>} : memref<1x8x128xf32, #tpu.memory_space<vmem>>, vector<1x8x128xf32>,
    } else {
    }
    return
  }
  func.func @transform_0(%arg0: i32, %arg1: i32) -> (i32, i32) {
    %c1_i32 = arith.constant 1 : i32
    %0 = arith.muli %arg0, %c1_i32 : i32
    %1 = arith.addi %0, %arg1 : i32
    %c0_i32 = arith.constant 0 : i32
    %2 = arith.minsi %1, %c0_i32 : i32
    %c0_i32_0 = arith.constant 0 : i32
    %c0_i32_1 = arith.constant 0 : i32
    return %2, %c0_i32_0 : i32, i32
  }
  func.func @transform_1(%arg0: i32, %arg1: i32) -> (i32, i32) {
    %c1_i32 = arith.constant 1 : i32
    %0 = arith.muli %arg0, %c1_i32 : i32
    %1 = arith.addi %0, %arg1 : i32
    %c0_i32 = arith.constant 0 : i32
    %2 = arith.minsi %1, %c0_i32 : i32
    %c0_i32_0 = arith.constant 0 : i32
    %c0_i32_1 = arith.constant 0 : i32
    return %2, %c0_i32_0 : i32, i32
  }
  func.func @transform_2(%arg0: i32, %arg1: i32) -> (i32, i32, i32) {
    %c0_i32 = arith.constant 0 : i32
    %c0_i32_0 = arith.constant 0 : i32
    %c0_i32_1 = arith.constant 0 : i32
    return %arg0, %c0_i32, %c0_i32_0 : i32, i32, i32
  }
}

</mosaic_0001>

<llo_original>
// kernel: tpu_custom_call.1
$region0: #{tpu_custom_call.1}
  #allocation0 [shape = 'u32[]', space=smem, size = 0x4, offset = 0x4, fixed_abs, tag = 'smem constant byte address 0x4 - core index']
  #allocation1 [shape = 'u32[144,128]{1,0:T(1,128)}', space=vmem, size = 0x12000, scoped, tag = 'internal scratch']
  #allocation2 [shape = 'f32[8,128]{1,0:T(8,128)}', space=vmem, size = 0x1000, scoped, tag = 'scratch operand']
  %s0 = inlined_call_operand.hbm [shape: f32[16,128], index: 0, kind: input, shape index: {}]
  %s1 = inlined_call_operand.hbm [shape: f32[16,128], index: 1, kind: input, shape index: {}]
  %s2 = inlined_call_operand.hbm [shape: f32[1,8,128], index: 2, kind: output, shape index: {}]
  %s3 = sld [smem:[#allocation0]]
  $region34: #{tpu_custom_call.1} parent=0
    _
  %s5 = ssub.s32 1, %s3
  %s6 = scalar_select 0, %s5, %s3
  $region1: #{tpu_custom_call.1} parent=0
    #allocation3 [shape = 'u8[8192]{0}', space=vmem, size = 0x2000, scoped, tag = 'input window, operand 0, single buffered']
    #allocation4 [shape = 's32[1]{0}', space=sflag, size = 0x4, scoped, tag = 'scoped memory for tpu_custom_call.1']
    #allocation5 [shape = 's32[1]{0}', space=sflag, size = 0x4, scoped, tag = 'scoped memory for tpu_custom_call.1']
    #allocation6 [shape = 'u8[8192]{0}', space=vmem, size = 0x2000, scoped, tag = 'input window, operand 1, single buffered']
    #allocation7 [shape = 's32[1]{0}', space=sflag, size = 0x4, scoped, tag = 'scoped memory for tpu_custom_call.1']
    #allocation8 [shape = 'u8[4096]{0}', space=vmem, size = 0x1000, scoped, tag = 'output window, operand 0, single buffered']
    %7 = vsyncpa [#allocation4], 0
    %8 = vsyncpa [#allocation7], 0
    %9 = vsyncpa [#allocation5], 0
    // Predicated region
    $region2: #{tpu_custom_call.1} parent=1 // pred_check
      _
    $region3: #{tpu_custom_call.1} parent=1 // pred_check_branch
      %11 = sbr.rel (0) target = $region5
    $region4: #{tpu_custom_call.1} parent=1 // pred_region
      %s12 = sadd.s32 0, 0
      %p13 = scmp.lt.s32.totalorder %s12, 0
      %s14 = scalar_select %p13, %s12, 0
      %s15 = smul.u32 2, %s14
      %s17 = ssub.s32 256, 256
      %18 = vsyncadd [#allocation4], %s17
      %s19 = smul.addr %s15, 128
      %s20 = scalar_lea.hbm %s0, %s19
      %s21 = sshll.u32 [#allocation3], 4
      %s22 = int_to_ptr.vmem [resolvable:$true] %s21
      %27 = dma.hbm_to_vmem [thread:$0]  %s20, 256, %s22, [#allocation4], 128, 128, 8
    $region5: #{tpu_custom_call.1} parent=1 // pred_fallthru
      _
    // Predicated region
    $region6: #{tpu_custom_call.1} parent=1 // pred_check
      _
    $region7: #{tpu_custom_call.1} parent=1 // pred_check_branch
      %29 = sbr.rel (0) target = $region9
    $region8: #{tpu_custom_call.1} parent=1 // pred_region
      %s30 = sadd.s32 0, 0
      %p31 = scmp.lt.s32.totalorder %s30, 0
      %s32 = scalar_select %p31, %s30, 0
      %s33 = smul.u32 2, %s32
      %s35 = ssub.s32 256, 256
      %36 = vsyncadd [#allocation7], %s35
      %s37 = smul.addr %s33, 128
      %s38 = scalar_lea.hbm %s1, %s37
      %s39 = sshll.u32 [#allocation6], 4
      %s40 = int_to_ptr.vmem [resolvable:$true] %s39
      %45 = dma.hbm_to_vmem [thread:$0]  %s38, 256, %s40, [#allocation7], 128, 128, 8
    $region9: #{tpu_custom_call.1} parent=1 // pred_fallthru
      _
    // Predicated region
    $region10: #{tpu_custom_call.1} parent=1 // pred_check
      _
    $region11: #{tpu_custom_call.1} parent=1 // pred_check_branch
      %47 = sbr.rel (0) target = $region13
    $region12: #{tpu_custom_call.1} parent=1 // pred_region
      %48 = dma.done [#allocation4], 256
    $region13: #{tpu_custom_call.1} parent=1 // pred_fallthru
      _
    // Predicated region
    $region14: #{tpu_custom_call.1} parent=1 // pred_check
      _
    $region15: #{tpu_custom_call.1} parent=1 // pred_check_branch
      %50 = sbr.rel (0) target = $region17
    $region16: #{tpu_custom_call.1} parent=1 // pred_region
      %51 = dma.done [#allocation7], 256
    $region17: #{tpu_custom_call.1} parent=1 // pred_fallthru
      _
    %s52 = sadd.s32 0, 0
    %p53 = scmp.lt.s32.totalorder %s52, 0
    %s54 = scalar_select %p53, %s52, 0
    %s55 = smul.u32 2, %s54
    %s56 = sadd.s32 0, 0
    %p57 = scmp.lt.s32.totalorder %s56, 0
    %s58 = scalar_select %p57, %s56, 0
    %s59 = smul.u32 2, %s58
    %p60 = scmp.eq.s32.totalorder 0, 0
    // Predicated region
    $region18: #{tpu_custom_call.1} parent=1 // pred_check
      %p61 = pneg %p60
    $region19: #{tpu_custom_call.1} parent=1 // pred_check_branch
      %63 = sbr.rel (%p61) target = $region21
    $region20: #{tpu_custom_call.1} parent=1 // pred_region
      %64 = vst [vmem:[#allocation2] sm:$0xff] 0.0
    $region21: #{tpu_custom_call.1} parent=1 // pred_fallthru
      _
    %v65 = vld [vmem:[#allocation3] sm:$0xff]
    %v66 = vld [vmem:[#allocation3 + $0x8] sm:$0xff]
    %v67 = vld [vmem:[#allocation6] sm:$0xff]
    %v68 = vld [vmem:[#allocation6 + $0x8] sm:$0xff]
    %v69 = vsub.f32 %v65, %v67
    %v70 = vsub.f32 %v66, %v68
    %v71 = vand.u32 2147483647, %v69
    %v72 = vand.u32 2147483647, %v70
    %v73 = vld [vmem:[#allocation2] sm:$0xff]
    %v74 = vadd.f32 %v71, %v72
    %v75 = vadd.f32 %v73, %v74
    %76 = vst [vmem:[#allocation2] sm:$0xff] %v75
    // Predicated region
    $region22: #{tpu_custom_call.1} parent=1 // pred_check
      %p77 = pneg %p60
    $region23: #{tpu_custom_call.1} parent=1 // pred_check_branch
      %79 = sbr.rel (%p77) target = $region25
    $region24: #{tpu_custom_call.1} parent=1 // pred_region
      %v80 = vld [vmem:[#allocation2] sm:$0xff]
      %81 = vst [vmem:[#allocation8] sm:$0xff] %v80
    $region25: #{tpu_custom_call.1} parent=1 // pred_fallthru
      _
    // Predicated region
    $region26: #{tpu_custom_call.1} parent=1 // pred_check
      _
    $region27: #{tpu_custom_call.1} parent=1 // pred_check_branch
      %83 = sbr.rel (0) target = $region29
    $region28: #{tpu_custom_call.1} parent=1 // pred_region
      %s85 = ssub.s32 128, 128
      %86 = vsyncadd [#allocation5], %s85
      %s88 = sshll.u32 [#allocation8], 4
      %s89 = int_to_ptr.vmem [resolvable:$true] %s88
      %91 = dma.vmem_to_hbm [thread:$0]  %s89, 128, %s2, [#allocation5]
    $region29: #{tpu_custom_call.1} parent=1 // pred_fallthru
      _
    // Predicated region
    $region30: #{tpu_custom_call.1} parent=1 // pred_check
      _
    $region31: #{tpu_custom_call.1} parent=1 // pred_check_branch
      %93 = sbr.rel (0) target = $region33
    $region32: #{tpu_custom_call.1} parent=1 // pred_region
      %94 = dma.done [#allocation5], 128
    $region33: #{tpu_custom_call.1} parent=1 // pred_fallthru
      _
    %95 = vsyncpa [#allocation4], 1
    %96 = vsyncpa [#allocation7], 1
    %97 = vsyncpa [#allocation5], 1

</llo_original>
